<compile_context>
chip_gen: v6e
topology: v6e:2x2x1
jax: 0.10.0
libtpu: 0.0.40
codegen_flags: <defaults>
</compile_context>

<pallas_src>
import jax
import jax.numpy as jnp
from jax import lax
from jax.experimental import pallas as pl
from jax.experimental.pallas import tpu as pltpu

EPS = 1e-5  # PyTorch nn.LayerNorm default


def _round_up(x, m):
    return ((x + m - 1) // m) * m


def _vmem_capacity_bytes():
    """Physical VMEM per TensorCore; conservative fallback = 64 MiB (v7x)."""
    try:
        return int(pltpu.get_tpu_info().vmem_capacity_bytes)
    except Exception:
        return 64 * 1024 * 1024


def _vmem_limit_bytes(capacity):
    # Leave headroom: 96 MiB on 128 MiB parts (v5e/v6e), 48 MiB on v7x.
    return min((capacity * 3) // 4, 96 * 1024 * 1024)


def _layernorm_rows_f32(x_f32, g_f32, b_f32):
    """One-pass LayerNorm over the last dim of an (rows, D) f32 tile."""
    d = x_f32.shape[-1]
    mean = jnp.sum(x_f32, axis=-1, keepdims=True) * (1.0 / d)
    ex2 = jnp.sum(x_f32 * x_f32, axis=-1, keepdims=True) * (1.0 / d)
    var = jnp.maximum(ex2 - mean * mean, 0.0)            # biased variance
    inv = lax.rsqrt(var + EPS)
    return (x_f32 - mean) * inv * g_f32 + b_f32


def _pick_tm(total_rows, block_m, min_tiles=4):
    """Token-tile rows: multiple of 8, VMEM-friendly, >= min_tiles tiles."""
    tm = min(block_m, _round_up(total_rows, 8))
    if total_rows >= min_tiles * 8:
        tm = min(tm, max(8, _round_up(pl.cdiv(total_rows, min_tiles), 8)))
    return max(8, tm)


# ---------------------------------------------------------------------------
# Fused PreNorm + Linear, weight-resident path (1-D grid over token tiles).
# ---------------------------------------------------------------------------
def _prenorm_linear_resident_kernel(x_ref, g_ref, b_ref, w_ref, lb_ref, o_ref):
    x = x_ref[...].astype(jnp.float32)                          # (tm, D)
    y = _layernorm_rows_f32(x, g_ref[...].astype(jnp.float32),
                            b_ref[...].astype(jnp.float32))
    acc = jnp.dot(y.astype(w_ref.dtype), w_ref[...],
                  preferred_element_type=jnp.float32)           # (tm, D_out)
    o_ref[...] = (acc + lb_ref[...].astype(jnp.float32)).astype(o_ref.dtype)


# ---------------------------------------------------------------------------
# Fused PreNorm + Linear, tiled-output-feature fallback (W too big for VMEM).
# The normalized tile is computed once (j == 0) and reused for all j.
# ---------------------------------------------------------------------------
def _prenorm_linear_tiled_kernel(x_ref, g_ref, b_ref, w_ref, lb_ref, o_ref,
                                 y_ref):
    @pl.when(pl.program_id(1) == 0)
    def _():
        x = x_ref[...].astype(jnp.float32)                      # (tm, D)
        y = _layernorm_rows_f32(x, g_ref[...].astype(jnp.float32),
                                b_ref[...].astype(jnp.float32))
        y_ref[...] = y.astype(y_ref.dtype)

    acc = jnp.dot(y_ref[...], w_ref[...],
                  preferred_element_type=jnp.float32)           # (tm, tn)
    o_ref[...] = (acc + lb_ref[...].astype(jnp.float32)).astype(o_ref.dtype)


def pre_norm_linear(x, gamma, beta, w, bias=None, *,
                    block_m=256, block_n=256, out_dtype=None, w_resident=None):
    """Fused PreNorm(dim, Linear): Linear(LayerNorm(x)).

    x: (B, N, D); gamma/beta: (D,); w: (D, D_out) (bf16 recommended);
    bias: (D_out,) or None.  The matmul runs in w.dtype with f32 accumulation.
    """
    B, N, D = x.shape
    D_out = w.shape[1]
    out_dtype = x.dtype if out_dtype is None else out_dtype
    T = B * N
    x2 = x.reshape(T, D)
    g2 = gamma.reshape(1, D)
    b2 = beta.reshape(1, D)
    lb = bias if bias is not None else jnp.zeros((D_out,), dtype=w.dtype)
    lb2 = lb.reshape(1, D_out)

    capacity = _vmem_capacity_bytes()
    budget = capacity // 2
    vmem_limit = _vmem_limit_bytes(capacity)

    x_it = x.dtype.itemsize
    w_it = w.dtype.itemsize
    o_it = jnp.dtype(out_dtype).itemsize

    tm = _pick_tm(T, block_m)
    # Cap tm so the per-tile working set fits the budget for huge D / D_out.
    per_row = 2 * D * x_it + 2 * D_out * o_it + 2 * D * 4 + D_out * 4
    tm = max(8, min(tm, max(8, (budget // max(per_row, 1)) // 8 * 8)))
    grid_m = pl.cdiv(T, tm)

    w_bytes = D * D_out * w_it
    resident_bytes = (2 * tm * D * x_it + 2 * tm * D_out * o_it
                      + 2 * w_bytes + 2 * tm * D * 4 + tm * D_out * 4)
    if w_resident is None:
        w_resident = resident_bytes <= budget

    if w_resident:
        out = pl.pallas_call(
            _prenorm_linear_resident_kernel,
            out_shape=jax.ShapeDtypeStruct((T, D_out), out_dtype),
            grid_spec=pltpu.PrefetchScalarGridSpec(
                num_scalar_prefetch=0,
                grid=(grid_m,),
                in_specs=[
                    pl.BlockSpec((tm, D), lambda i: (i, 0)),      # tokens
                    pl.BlockSpec((1, D), lambda i: (0, 0)),       # gamma
                    pl.BlockSpec((1, D), lambda i: (0, 0)),       # beta
                    pl.BlockSpec((D, D_out), lambda i: (0, 0)),   # W (resident)
                    pl.BlockSpec((1, D_out), lambda i: (0, 0)),   # linear bias
                ],
                out_specs=pl.BlockSpec((tm, D_out), lambda i: (i, 0)),
            ),
            compiler_params=pltpu.CompilerParams(
                dimension_semantics=("parallel",),
                vmem_limit_bytes=vmem_limit),
        )(x2, g2, b2, w, lb2)
        return out.reshape(B, N, D_out)

    # ---- tiled output-feature fallback ------------------------------------
    if D_out <= block_n:
        tn = D_out
    else:
        assert block_n % 128 == 0, "block_n must be a multiple of 128"
        tn = block_n
    grid_n = pl.cdiv(D_out, tn)

    out = pl.pallas_call(
        _prenorm_linear_tiled_kernel,
        out_shape=jax.ShapeDtypeStruct((T, D_out), out_dtype),
        grid_spec=pltpu.PrefetchScalarGridSpec(
            num_scalar_prefetch=0,
            grid=(grid_m, grid_n),
            in_specs=[
                pl.BlockSpec((tm, D), lambda i, j: (i, 0)),       # tokens
                pl.BlockSpec((1, D), lambda i, j: (0, 0)),        # gamma
                pl.BlockSpec((1, D), lambda i, j: (0, 0)),        # beta
                pl.BlockSpec((D, tn), lambda i, j: (0, j)),       # W tile
                pl.BlockSpec((1, tn), lambda i, j: (0, j)),       # bias tile
            ],
            out_specs=pl.BlockSpec((tm, tn), lambda i, j: (i, j)),
            scratch_shapes=[pltpu.VMEM((tm, D), w.dtype)],        # normalized y
        ),
        compiler_params=pltpu.CompilerParams(
            dimension_semantics=("parallel", "arbitrary"),
            vmem_limit_bytes=vmem_limit),
    )(x2, g2, b2, w, lb2)
    return out.reshape(B, N, D_out)


# ---------------------------------------------------------------------------
# Standalone LayerNorm kernel (generic-`fn` path), large token tiles.
# ---------------------------------------------------------------------------
def _layernorm_kernel(x_ref, g_ref, b_ref, o_ref):
    x = x_ref[...].astype(jnp.float32)
    y = _layernorm_rows_f32(x, g_ref[...].astype(jnp.float32),
                            b_ref[...].astype(jnp.float32))
    o_ref[...] = y.astype(o_ref.dtype)


def layernorm_pallas(x, gamma, beta, *, block_tokens=1024, out_dtype=None):
    """x: (B, N, D); gamma/beta: (D,). LayerNorm over the last dim."""
    B, N, D = x.shape
    out_dtype = x.dtype if out_dtype is None else out_dtype
    T = B * N
    x2 = x.reshape(T, D)
    g2 = gamma.reshape(1, D)
    b2 = beta.reshape(1, D)

    capacity = _vmem_capacity_bytes()
    budget = capacity // 2
    per_row = 2 * D * (x.dtype.itemsize + jnp.dtype(out_dtype).itemsize) + 4 * D * 4
    tm = _pick_tm(T, block_tokens)
    tm = max(8, min(tm, max(8, (budget // max(per_row, 1)) // 8 * 8)))
    grid_m = pl.cdiv(T, tm)

    out = pl.pallas_call(
        _layernorm_kernel,
        out_shape=jax.ShapeDtypeStruct((T, D), out_dtype),
        grid_spec=pltpu.PrefetchScalarGridSpec(
            num_scalar_prefetch=0,
            grid=(grid_m,),
            in_specs=[
                pl.BlockSpec((tm, D), lambda i: (i, 0)),
                pl.BlockSpec((1, D), lambda i: (0, 0)),
                pl.BlockSpec((1, D), lambda i: (0, 0)),
            ],
            out_specs=pl.BlockSpec((tm, D), lambda i: (i, 0)),
        ),
        compiler_params=pltpu.CompilerParams(
            dimension_semantics=("parallel",),
            vmem_limit_bytes=_vmem_limit_bytes(capacity)),
    )(x2, g2, b2)
    return out.reshape(B, N, D)


# ---------------------------------------------------------------------------
# PreNorm: fn(LayerNorm(x), *args, **kwargs)  (generic fn — no fusion)
# ---------------------------------------------------------------------------
def pre_norm(x, gamma, beta, fn, *args, **kwargs):
    # TODO(synk): arbitrary nn.Module `fn` stays a JAX callable; only the
    # Linear case is fused into a single Pallas kernel (pre_norm_linear).
    return fn(layernorm_pallas(x, gamma, beta), *args, **kwargs)


if __name__ == "__main__":
    key = jax.random.PRNGKey(0)
    # Lane-dense shapes (D, D_out multiples of 128); token axis large enough
    # for a parallel grid extent of 4 (feeds both v7x TensorCores).
    B, N, D, D_out = 2, 256, 128, 256

    kx, kw, kb, kg, kbeta = jax.random.split(key, 5)
    x = jax.random.normal(kx, (B, N, D), dtype=jnp.float32)

    gamma = (1.0 + 0.1 * jax.random.normal(kg, (D,))).astype(jnp.float32)
    beta = (0.05 * jax.random.normal(kbeta, (D,))).astype(jnp.float32)

    # Linear weights in bf16 (MXU-friendly); bias in f32.
    w = (jax.random.normal(kw, (D, D_out), dtype=jnp.float32) * 0.02
         ).astype(jnp.bfloat16)
    lin_bias = (jax.random.normal(kb, (D_out,), dtype=jnp.float32) * 0.01)

    # --- fused PreNorm + Linear, weight-resident path ----------------------
    out_res = pre_norm_linear(x, gamma, beta, w, lin_bias)
    out_res = jax.block_until_ready(out_res)

    # --- fused PreNorm + Linear, forced tiled path (exercises fallback) ----
    out_tiled = pre_norm_linear(x, gamma, beta, w, lin_bias,
                                block_n=128, w_resident=False)
    out_tiled = jax.block_until_ready(out_tiled)

    # --- generic-fn path (identity fn => pure LayerNorm kernel) ------------
    out_ln = pre_norm(x, gamma, beta, lambda y: y)
    out_ln = jax.block_until_ready(out_ln)

    # Pure-JAX reference (two-pass f32 LayerNorm; matmul with the same bf16
    # input rounding the kernel applies, accumulated in f32).
    mean = jnp.mean(x, axis=-1, keepdims=True)
    var = jnp.mean((x - mean) ** 2, axis=-1, keepdims=True)
    ref_norm = (x - mean) / jnp.sqrt(var + EPS) * gamma + beta
    y_bf16 = ref_norm.astype(jnp.bfloat16).astype(jnp.float32)
    w_f32 = w.astype(jnp.float32)
    ref_out = jnp.einsum("bnd,de->bne", y_bf16, w_f32) + lin_bias

    assert out_res.shape == (B, N, D_out)
    assert out_tiled.shape == (B, N, D_out)
    assert out_ln.shape == (B, N, D)
    assert jnp.allclose(out_res, ref_out, atol=1e-2, rtol=1e-2)
    assert jnp.allclose(out_tiled, ref_out, atol=1e-2, rtol=1e-2)
    assert jnp.allclose(out_ln, ref_norm, atol=1e-4, rtol=1e-4)

    print("KERNEL_OK")
</pallas_src>

<mosaic_0001>
module attributes {stable_mosaic.version = 11 : i64} {
  func.func @_prenorm_linear_resident_kernel(%arg0: i32, %arg1: memref<128x128xf32, #tpu.memory_space<vmem>>, %arg2: memref<1x128xf32, #tpu.memory_space<vmem>>, %arg3: memref<1x128xf32, #tpu.memory_space<vmem>>, %arg4: memref<128x256xbf16, #tpu.memory_space<vmem>>, %arg5: memref<1x256xf32, #tpu.memory_space<vmem>>, %arg6: memref<128x256xf32, #tpu.memory_space<vmem>>) attributes {dimension_semantics = [#tpu.dimension_semantics<parallel>], iteration_bounds = array<i64: 4>, scalar_prefetch = 0 : i64, scratch_operands = 0 : i64, tpu.core_type = #tpu.core_type<tc>, window_params = [{transform_indices = @transform_0, window_bounds = array<i64: 128, 128>}, {pipeline_mode = #tpu.pipeline_mode<synchronous>, transform_indices = @transform_1, window_bounds = array<i64: 1, 128>}, {pipeline_mode = #tpu.pipeline_mode<synchronous>, transform_indices = @transform_2, window_bounds = array<i64: 1, 128>}, {pipeline_mode = #tpu.pipeline_mode<synchronous>, transform_indices = @transform_3, window_bounds = array<i64: 128, 256>}, {pipeline_mode = #tpu.pipeline_mode<synchronous>, transform_indices = @transform_4, window_bounds = array<i64: 1, 256>}, {transform_indices = @transform_5, window_bounds = array<i64: 128, 256>}]} {
    %c0 = arith.constant 0 : index
    %c0_0 = arith.constant 0 : index
    %0 = vector.load %arg1[%c0, %c0_0] : memref<128x128xf32, #tpu.memory_space<vmem>>, vector<128x128xf32>
    %c0_1 = arith.constant 0 : index
    %c0_2 = arith.constant 0 : index
    %1 = vector.load %arg2[%c0_1, %c0_2] : memref<1x128xf32, #tpu.memory_space<vmem>>, vector<1x128xf32>
    %c0_3 = arith.constant 0 : index
    %c0_4 = arith.constant 0 : index
    %2 = vector.load %arg3[%c0_3, %c0_4] : memref<1x128xf32, #tpu.memory_space<vmem>>, vector<1x128xf32>
    %cst = arith.constant dense<0.000000e+00> : vector<128xf32>
    %3 = vector.multi_reduction <add>, %0, %cst [1] : vector<128x128xf32> to vector<128xf32>
    %4 = vector.shape_cast %3 : vector<128xf32> to vector<128x1xf32>
    %cst_5 = arith.constant 7.812500e-03 : f32
    %5 = vector.broadcast %cst_5 : f32 to vector<128x1xf32>
    %6 = arith.mulf %4, %5 : vector<128x1xf32>
    %7 = arith.mulf %0, %0 : vector<128x128xf32>
    %cst_6 = arith.constant dense<0.000000e+00> : vector<128xf32>
    %8 = vector.multi_reduction <add>, %7, %cst_6 [1] : vector<128x128xf32> to vector<128xf32>
    %9 = vector.shape_cast %8 : vector<128xf32> to vector<128x1xf32>
    %cst_7 = arith.constant 7.812500e-03 : f32
    %10 = vector.broadcast %cst_7 : f32 to vector<128x1xf32>
    %11 = arith.mulf %9, %10 : vector<128x1xf32>
    %12 = arith.mulf %6, %6 : vector<128x1xf32>
    %13 = arith.subf %11, %12 : vector<128x1xf32>
    %cst_8 = arith.constant 0.000000e+00 : f32
    %14 = vector.broadcast %cst_8 : f32 to vector<128x1xf32>
    %15 = arith.maximumf %13, %14 : vector<128x1xf32>
    %cst_9 = arith.constant 9.99999974E-6 : f32
    %16 = vector.broadcast %cst_9 : f32 to vector<128x1xf32>
    %17 = arith.addf %15, %16 : vector<128x1xf32>
    %18 = math.rsqrt %17 : vector<128x1xf32>
    %19 = vector.broadcast %6 : vector<128x1xf32> to vector<128x128xf32>
    %20 = arith.subf %0, %19 : vector<128x128xf32>
    %21 = vector.broadcast %18 : vector<128x1xf32> to vector<128x128xf32>
    %22 = arith.mulf %20, %21 : vector<128x128xf32>
    %23 = vector.broadcast %1 : vector<1x128xf32> to vector<128x128xf32>
    %24 = arith.mulf %22, %23 : vector<128x128xf32>
    %25 = vector.broadcast %2 : vector<1x128xf32> to vector<128x128xf32>
    %26 = arith.addf %24, %25 : vector<128x128xf32>
    %27 = arith.truncf %26 : vector<128x128xf32> to vector<128x128xbf16>
    %c0_10 = arith.constant 0 : index
    %c0_11 = arith.constant 0 : index
    %28 = vector.load %arg4[%c0_10, %c0_11] : memref<128x256xbf16, #tpu.memory_space<vmem>>, vector<128x256xbf16>
    %cst_12 = arith.constant dense<0.000000e+00> : vector<128x256xf32>
    %29 = tpu.matmul %27, %28, %cst_12 {dimension_numbers = #tpu.dot_dimension_numbers<[1], [0], [0], [1], [0, 0, 1, 1], [], []>} : vector<128x128xbf16>, vector<128x256xbf16>, vector<128x256xf32> -> vector<128x256xf32>
    %c0_13 = arith.constant 0 : index
    %c0_14 = arith.constant 0 : index
    %30 = vector.load %arg5[%c0_13, %c0_14] : memref<1x256xf32, #tpu.memory_space<vmem>>, vector<1x256xf32>
    %31 = vector.broadcast %30 : vector<1x256xf32> to vector<128x256xf32>
    %32 = arith.addf %29, %31 : vector<128x256xf32>
    %c0_15 = arith.constant 0 : index
    %c0_16 = arith.constant 0 : index
    %33 = vector.load %arg6[%c0_15, %c0_16] : memref<128x256xf32, #tpu.memory_space<vmem>>, vector<128x256xf32>
    tpu.vector_store %arg6[%c0_15, %c0_16], %32 {strides = array<i32>} : memref<128x256xf32, #tpu.memory_space<vmem>>, vector<128x256xf32>,
    return
  }
  func.func @transform_0(%arg0: i32) -> (i32, i32) {
    %c0_i32 = arith.constant 0 : i32
    %c0_i32_0 = arith.constant 0 : i32
    return %arg0, %c0_i32 : i32, i32
  }
  func.func @transform_1(%arg0: i32) -> (i32, i32) {
    %c0_i32 = arith.constant 0 : i32
    %c0_i32_0 = arith.constant 0 : i32
    %c0_i32_1 = arith.constant 0 : i32
    return %c0_i32, %c0_i32_0 : i32, i32
  }
  func.func @transform_2(%arg0: i32) -> (i32, i32) {
    %c0_i32 = arith.constant 0 : i32
    %c0_i32_0 = arith.constant 0 : i32
    %c0_i32_1 = arith.constant 0 : i32
    return %c0_i32, %c0_i32_0 : i32, i32
  }
  func.func @transform_3(%arg0: i32) -> (i32, i32) {
    %c0_i32 = arith.constant 0 : i32
    %c0_i32_0 = arith.constant 0 : i32
    %c0_i32_1 = arith.constant 0 : i32
    return %c0_i32, %c0_i32_0 : i32, i32
  }
  func.func @transform_4(%arg0: i32) -> (i32, i32) {
    %c0_i32 = arith.constant 0 : i32
    %c0_i32_0 = arith.constant 0 : i32
    %c0_i32_1 = arith.constant 0 : i32
    return %c0_i32, %c0_i32_0 : i32, i32
  }
  func.func @transform_5(%arg0: i32) -> (i32, i32) {
    %c0_i32 = arith.constant 0 : i32
    %c0_i32_0 = arith.constant 0 : i32
    return %arg0, %c0_i32 : i32, i32
  }
}

</mosaic_0001>

<llo_original>
// kernel: tpu_custom_call.1
$region0: #{tpu_custom_call.1}
  #allocation0 [shape = 'u32[]', space=smem, size = 0x4, offset = 0x4, fixed_abs, tag = 'smem constant byte address 0x4 - core index']
  #allocation1 [shape = 'u32[144,128]{1,0:T(1,128)}', space=vmem, size = 0x12000, scoped, tag = 'internal scratch']
  %s0 = inlined_call_operand.hbm [shape: f32[512,128], index: 0, kind: input, shape index: {}]
  %s1 = inlined_call_operand.vmem [shape: f32[1,128], index: 1, kind: input, shape index: {}]
  %s2 = inlined_call_operand.hbm [shape: f32[1,128], index: 2, kind: input, shape index: {}]
  %s3 = inlined_call_operand.hbm [shape: bf16[128,256], index: 3, kind: input, shape index: {}]
  %s4 = inlined_call_operand.vmem [shape: f32[1,256], index: 4, kind: input, shape index: {}]
  %s5 = inlined_call_operand.hbm [shape: f32[512,256], index: 5, kind: output, shape index: {}]
  %s6 = sld [smem:[#allocation0]]
  $region65: #{tpu_custom_call.1} parent=0
    _
  %s8 = ssub.s32 1, %s6
  %s9 = scalar_select 0, %s8, %s6
  $region1: #{tpu_custom_call.1} parent=0
    #allocation2 [shape = 'u8[131072]{0}', space=vmem, size = 0x20000, scoped, tag = 'input window, operand 0']
    #allocation3 [shape = 's32[2]{0}', space=sflag, size = 0x8, scoped, tag = 'scoped memory for tpu_custom_call.1']
    #allocation4 [shape = 's32[2]{0}', space=sflag, size = 0x8, scoped, tag = 'scoped memory for tpu_custom_call.1']
    #allocation5 [shape = 'u8[512]{0}', space=vmem, size = 0x400, scoped, tag = 'input window, operand 2, single buffered']
    #allocation6 [shape = 's32[1]{0}', space=sflag, size = 0x4, scoped, tag = 'scoped memory for tpu_custom_call.1']
    #allocation7 [shape = 'u8[65536]{0}', space=vmem, size = 0x10000, scoped, tag = 'input window, operand 3, single buffered']
    #allocation8 [shape = 'u8[262144]{0}', space=vmem, size = 0x40000, scoped, tag = 'output window, operand 0']
    %10 = vsyncpa [#allocation3], 0
    %s11 = scalar_lea.sflag [#allocation3], 1
    %12 = vsyncpa %s11, 0
    %13 = vsyncpa [#allocation6], 0
    %14 = vsyncpa [#allocation4], 0
    %s15 = scalar_lea.sflag [#allocation4], 1
    %16 = vsyncpa %s15, 0
    loop: start=0, step=1, limit=6
    $region2: #{tpu_custom_call.1} parent=1 // loop_pre_header
      _
    $region3: #{tpu_custom_call.1} parent=1 // loop_header
      %s18 = sphi 0, %s22
      %p19 = scmp.ge.s32.totalorder %s18, 6
      %s28 = sphi 0, %s30
      %s31 = sphi 0, %s28
      %s32 = sphi 0, %s31
      %s48 = sphi 0, %s32
      %s52 = sphi 0, %s52
      %s54 = sphi 0, %s52
      %s55 = sphi 0, %s54
      %s69 = sphi 0, %s55
      %s73 = sphi 0, %s73
      %s75 = sphi 0, %s73
      %s76 = sphi 0, %s75
      %s90 = sphi 0, %s76
      %s94 = sphi 0, %s94
      %s96 = sphi 0, %s94
      %s97 = sphi 0, %s96
      %s111 = sphi 0, %s97
      %s115 = sphi 0, %s115
      %s117 = sphi 0, %s115
      %s118 = sphi 0, %s117
      %s132 = sphi 0, %s118
      %s138 = sphi 0, %s140
      %s141 = sphi 0, %s138
      %s142 = sphi 0, %s141
      %s158 = sphi 0, %s142
    $region4: #{tpu_custom_call.1} parent=1 // loop_header_branch
      %21 = sbr.rel (%p19) target = $region8
    $region5: #{tpu_custom_call.1} parent=1 // loop_body
      %s23 = ssub.s32 %s18, 1
      %s24 = ssub.s32 %s18, 2
      %s25 = sadd.s32 %s18, 1
      %s26 = ssub.s32 %s18, %s25
      %p27 = scmp.eq.s32.totalorder %s26, 0
      %s29 = sadd.s32 %s28, 1
      %s30 = scalar_select %p27, %s28, %s29
      %p33 = pneg %p27
      %p34 = scmp.eq.s32.totalorder %s18, 3
      %p35 = por %p33, %p34
      %p36 = scmp.ne.s32.totalorder %s28, %s31
      %p37 = scmp.eq.s32.totalorder %s18, 0
      %p38 = por %p36, %p37
      %p39 = scmp.ne.s32.totalorder %s28, %s31
      %p40 = scmp.eq.s32.totalorder %s23, 3
      %p41 = por %p39, %p40
      %p42 = scmp.ne.s32.totalorder %s31, %s32
      %p43 = scmp.eq.s32.totalorder %s23, 0
      %p44 = por %p42, %p43
      %p45 = scmp.ne.s32.totalorder %s31, %s32
      %p46 = scmp.eq.s32.totalorder %s24, 3
      %p47 = por %p45, %p46
      %p49 = scmp.ne.s32.totalorder %s32, %s48
      %p50 = scmp.eq.s32.totalorder %s24, 0
      %p51 = por %p49, %p50
      %s53 = sadd.s32 %s52, 1
      %p56 = scmp.eq.s32.totalorder %s18, 3
      %p57 = scmp.ne.s32.totalorder %s52, %s54
      %p58 = scmp.eq.s32.totalorder %s18, 0
      %p59 = por %p57, %p58
      %p60 = scmp.ne.s32.totalorder %s52, %s54
      %p61 = scmp.eq.s32.totalorder %s23, 3
      %p62 = por %p60, %p61
      %p63 = scmp.ne.s32.totalorder %s54, %s55
      %p64 = scmp.eq.s32.totalorder %s23, 0
      %p65 = por %p63, %p64
      %p66 = scmp.ne.s32.totalorder %s54, %s55
      %p67 = scmp.eq.s32.totalorder %s24, 3
      %p68 = por %p66, %p67
      %p70 = scmp.ne.s32.totalorder %s55, %s69
      %p71 = scmp.eq.s32.totalorder %s24, 0
      %p72 = por %p70, %p71
      %s74 = sadd.s32 %s73, 1
      %p77 = scmp.eq.s32.totalorder %s18, 3
      %p78 = scmp.ne.s32.totalorder %s73, %s75
      %p79 = scmp.eq.s32.totalorder %s18, 0
      %p80 = por %p78, %p79
      %p81 = scmp.ne.s32.totalorder %s73, %s75
      %p82 = scmp.eq.s32.totalorder %s23, 3
      %p83 = por %p81, %p82
      %p84 = scmp.ne.s32.totalorder %s75, %s76
      %p85 = scmp.eq.s32.totalorder %s23, 0
      %p86 = por %p84, %p85
      %p87 = scmp.ne.s32.totalorder %s75, %s76
      %p88 = scmp.eq.s32.totalorder %s24, 3
      %p89 = por %p87, %p88
      %p91 = scmp.ne.s32.totalorder %s76, %s90
      %p92 = scmp.eq.s32.totalorder %s24, 0
      %p93 = por %p91, %p92
      %s95 = sadd.s32 %s94, 1
      %p98 = scmp.eq.s32.totalorder %s18, 3
      %p99 = scmp.ne.s32.totalorder %s94, %s96
      %p100 = scmp.eq.s32.totalorder %s18, 0
      %p101 = por %p99, %p100
      %p102 = scmp.ne.s32.totalorder %s94, %s96
      %p103 = scmp.eq.s32.totalorder %s23, 3
      %p104 = por %p102, %p103
      %p105 = scmp.ne.s32.totalorder %s96, %s97
      %p106 = scmp.eq.s32.totalorder %s23, 0
      %p107 = por %p105, %p106
      %p108 = scmp.ne.s32.totalorder %s96, %s97
      %p109 = scmp.eq.s32.totalorder %s24, 3
      %p110 = por %p108, %p109
      %p112 = scmp.ne.s32.totalorder %s97, %s111
      %p113 = scmp.eq.s32.totalorder %s24, 0
      %p114 = por %p112, %p113
      %s116 = sadd.s32 %s115, 1
      %p119 = scmp.eq.s32.totalorder %s18, 3
      %p120 = scmp.ne.s32.totalorder %s115, %s117
      %p121 = scmp.eq.s32.totalorder %s18, 0
      %p122 = por %p120, %p121
      %p123 = scmp.ne.s32.totalorder %s115, %s117
      %p124 = scmp.eq.s32.totalorder %s23, 3
      %p125 = por %p123, %p124
      %p126 = scmp.ne.s32.totalorder %s117, %s118
      %p127 = scmp.eq.s32.totalorder %s23, 0
      %p128 = por %p126, %p127
      %p129 = scmp.ne.s32.totalorder %s117, %s118
      %p130 = scmp.eq.s32.totalorder %s24, 3
      %p131 = por %p129, %p130
      %p133 = scmp.ne.s32.totalorder %s118, %s132
      %p134 = scmp.eq.s32.totalorder %s24, 0
      %p135 = por %p133, %p134
      %s136 = ssub.s32 %s18, %s25
      %p137 = scmp.eq.s32.totalorder %s136, 0
      %s139 = sadd.s32 %s138, 1
      %s140 = scalar_select %p137, %s138, %s139
      %p143 = pneg %p137
      %p144 = scmp.eq.s32.totalorder %s18, 3
      %p145 = por %p143, %p144
      %p146 = scmp.ne.s32.totalorder %s138, %s141
      %p147 = scmp.eq.s32.totalorder %s18, 0
      %p148 = por %p146, %p147
      %p149 = scmp.ne.s32.totalorder %s138, %s141
      %p150 = scmp.eq.s32.totalorder %s23, 3
      %p151 = por %p149, %p150
      %p152 = scmp.ne.s32.totalorder %s141, %s142
      %p153 = scmp.eq.s32.totalorder %s23, 0
      %p154 = por %p152, %p153
      %p155 = scmp.ne.s32.totalorder %s141, %s142
      %p156 = scmp.eq.s32.totalorder %s24, 3
      %p157 = por %p155, %p156
      %p159 = scmp.ne.s32.totalorder %s142, %s158
      %p160 = scmp.eq.s32.totalorder %s24, 0
      %p161 = por %p159, %p160
      %p162 = scmp.le.s32.totalorder 1, %s18
      %p163 = scmp.lt.s32.totalorder %s18, 5
      %p164 = pnand %p162, %p163
      %p165 = pneg %p164
      // Predicated region
      $region9: #{tpu_custom_call.1} parent=5 // pred_check
        _
      $region10: #{tpu_custom_call.1} parent=5 // pred_check_branch
        %167 = sbr.rel (%p164) target = $region12
      $region11: #{tpu_custom_call.1} parent=5 // pred_region
        %s168 = ssub.s32 %s18, 1
        // Predicated region
        $region13: #{tpu_custom_call.1} parent=11 // pred_check
          %p169 = pneg %p65
        $region14: #{tpu_custom_call.1} parent=11 // pred_check_branch
          %171 = sbr.rel (%p169) target = $region16
        $region15: #{tpu_custom_call.1} parent=11 // pred_region
          _
        $region16: #{tpu_custom_call.1} parent=11 // pred_fallthru
          _
        // Predicated region
        $region17: #{tpu_custom_call.1} parent=11 // pred_check
          %p172 = pneg %p86
        $region18: #{tpu_custom_call.1} parent=11 // pred_check_branch
          %174 = sbr.rel (%p172) target = $region20
        $region19: #{tpu_custom_call.1} parent=11 // pred_region
          %s176 = ssub.s32 16, 16
          %177 = vsyncadd [#allocation6], %s176
          %s179 = sshll.u32 [#allocation5], 4
          %s180 = int_to_ptr.vmem [resolvable:$true] %s179
          %182 = dma.hbm_to_vmem [thread:$0]  %s2, 16, %s180, [#allocation6]
        $region20: #{tpu_custom_call.1} parent=11 // pred_fallthru
          _
        // Predicated region
        $region21: #{tpu_custom_call.1} parent=11 // pred_check
          %p183 = pneg %p107
        $region22: #{tpu_custom_call.1} parent=11 // pred_check_branch
          %185 = sbr.rel (%p183) target = $region24
        $region23: #{tpu_custom_call.1} parent=11 // pred_region
          %s187 = ssub.s32 2048, 2048
          %188 = vsyncadd [#allocation6], %s187
          %s189 = sshll.u32 [#allocation7], 4
          %s190 = int_to_ptr.vmem [resolvable:$true] %s189
          %195 = dma.hbm_to_vmem [thread:$0]  %s3, 2048, %s190, [#allocation6], 128, 128, 8
        $region24: #{tpu_custom_call.1} parent=11 // pred_fallthru
          _
        // Predicated region
        $region25: #{tpu_custom_call.1} parent=11 // pred_check
          %p196 = pneg %p128
        $region26: #{tpu_custom_call.1} parent=11 // pred_check_branch
          %198 = sbr.rel (%p196) target = $region28
        $region27: #{tpu_custom_call.1} parent=11 // pred_region
          _
        $region28: #{tpu_custom_call.1} parent=11 // pred_fallthru
          _
      $region12: #{tpu_custom_call.1} parent=5 // pred_fallthru
        _
      %p199 = scmp.lt.s32.totalorder %s18, 4
      // Predicated region
      $region29: #{tpu_custom_call.1} parent=5 // pred_check
        %p200 = pneg %p199
      $region30: #{tpu_custom_call.1} parent=5 // pred_check_branch
        %202 = sbr.rel (%p200) target = $region32
      $region31: #{tpu_custom_call.1} parent=5 // pred_region
        // Predicated region
        $region33: #{tpu_custom_call.1} parent=31 // pred_check
          %p203 = pneg %p38
        $region34: #{tpu_custom_call.1} parent=31 // pred_check_branch
          %205 = sbr.rel (%p203) target = $region36
        $region35: #{tpu_custom_call.1} parent=31 // pred_region
          %s206 = sand.u32 %s28, 1
          %s207 = scalar_lea.sflag [#allocation3], %s206
          %s208 = sand.u32 %s28, 1
          %s209 = smul.addr %s208, 128
          %s210 = scalar_lea.vmem [#allocation2], %s209
          %s211 = smul.u32 16, %s18
          %s213 = ssub.s32 2048, 2048
          %214 = vsyncadd %s207, %s213
          %s215 = smul.addr %s211, 128
          %s216 = scalar_lea.hbm %s0, %s215
          %s217 = sshll.u32 %s210, 4
          %s218 = int_to_ptr.vmem [resolvable:$true] %s217
          %223 = dma.hbm_to_vmem [thread:$0]  %s216, 2048, %s218, %s207, 128, 128, 8
        $region36: #{tpu_custom_call.1} parent=31 // pred_fallthru
          _
      $region32: #{tpu_custom_call.1} parent=5 // pred_fallthru
        _
      %p224 = scmp.le.s32.totalorder 1, %s18
      %p225 = scmp.lt.s32.totalorder %s18, 5
      %p226 = pnand %p224, %p225
      %p227 = pneg %p226
      // Predicated region
      $region37: #{tpu_custom_call.1} parent=5 // pred_check
        _
      $region38: #{tpu_custom_call.1} parent=5 // pred_check_branch
        %229 = sbr.rel (%p226) target = $region40
      $region39: #{tpu_custom_call.1} parent=5 // pred_region
        %s230 = ssub.s32 %s18, 1
        %s231 = sand.u32 %s31, 1
        %s232 = scalar_lea.sflag [#allocation3], %s231
        %s233 = sand.u32 %s31, 1
        %s234 = smul.addr %s233, 128
        %s235 = scalar_lea.vmem [#allocation2], %s234
        // Predicated region
        $region41: #{tpu_custom_call.1} parent=39 // pred_check
          %p236 = pneg %p44
        $region42: #{tpu_custom_call.1} parent=39 // pred_check_branch
          %238 = sbr.rel (%p236) target = $region44
        $region43: #{tpu_custom_call.1} parent=39 // pred_region
          %239 = dma.done %s232, 2048
        $region44: #{tpu_custom_call.1} parent=39 // pred_fallthru
          _
        // Predicated region
        $region45: #{tpu_custom_call.1} parent=39 // pred_check
          %p240 = pneg %p86
        $region46: #{tpu_custom_call.1} parent=39 // pred_check_branch
          %242 = sbr.rel (%p240) target = $region48
        $region47: #{tpu_custom_call.1} parent=39 // pred_region
          %243 = dma.done [#allocation6], 16
        $region48: #{tpu_custom_call.1} parent=39 // pred_fallthru
          _
        // Predicated region
        $region49: #{tpu_custom_call.1} parent=39 // pred_check
          %p244 = pneg %p107
        $region50: #{tpu_custom_call.1} parent=39 // pred_check_branch
          %246 = sbr.rel (%p244) target = $region52
        $region51: #{tpu_custom_call.1} parent=39 // pred_region
          %247 = dma.done [#allocation6], 2048
        $region52: #{tpu_custom_call.1} parent=39 // pred_fallthru
          _
        %s248 = sand.u32 %s31, 1
        %s249 = scalar_lea.sflag [#allocation3], %s248
        %s250 = sand.u32 %s31, 1
        %s251 = smul.addr %s250, 128
        %s252 = scalar_lea.vmem [#allocation2], %s251
        %p253 = pneg %p44
        %p254 = pneg %p41
        %p255 = pneg %p65
        %p256 = pneg %p62
        %p257 = pneg %p86
        %p258 = pneg %p83
        %p259 = pneg %p107
        %p260 = pneg %p104
        %p261 = pneg %p128
        %p262 = pneg %p125
        %p263 = pneg %p154
        %p264 = pneg %p151
        %s265 = sand.u32 %s141, 1
        %s266 = scalar_lea.sflag [#allocation4], %s265
        %s267 = sand.u32 %s141, 1
        %s268 = smul.addr %s267, 256
        %s269 = scalar_lea.vmem [#allocation8], %s268
        %s270 = smul.u32 16, %s23
        %s271 = smul.u32 16, %s23
        %v273 = vld [vmem:[%s235] sm:$0xff]
        %v274 = vld [vmem:[%s235 + $0x8] sm:$0xff]
        %v275 = vld [vmem:[%s235 + $0x10] sm:$0xff]
        %v276 = vld [vmem:[%s235 + $0x18] sm:$0xff]
        %v277 = vld [vmem:[%s235 + $0x20] sm:$0xff]
        %v278 = vld [vmem:[%s235 + $0x28] sm:$0xff]
        %v279 = vld [vmem:[%s235 + $0x30] sm:$0xff]
        %v280 = vld [vmem:[%s235 + $0x38] sm:$0xff]
        %v281 = vld [vmem:[%s235 + $0x40] sm:$0xff]
        %v282 = vld [vmem:[%s235 + $0x48] sm:$0xff]
        %v283 = vld [vmem:[%s235 + $0x50] sm:$0xff]
        %v284 = vld [vmem:[%s235 + $0x58] sm:$0xff]
        %v285 = vld [vmem:[%s235 + $0x60] sm:$0xff]
        %v286 = vld [vmem:[%s235 + $0x68] sm:$0xff]
        %v287 = vld [vmem:[%s235 + $0x70] sm:$0xff]
        %v288 = vld [vmem:[%s235 + $0x78] sm:$0xff]
        %v289 = vld [vmem:[%s1] sm:$0x1]
        %v290 = vld [vmem:[#allocation5] sm:$0x1]
        %291 = vadd.xlane.f32.xlu0 %v273
        %v292 = vpop.xlane.xlu0 %291
        %293 = vadd.xlane.f32.xlu0 %v274
        %v294 = vpop.xlane.xlu0 %293
        %295 = vadd.xlane.f32.xlu0 %v275
        %v296 = vpop.xlane.xlu0 %295
        %297 = vadd.xlane.f32.xlu0 %v276
        %v298 = vpop.xlane.xlu0 %297
        %299 = vadd.xlane.f32.xlu0 %v277
        %v300 = vpop.xlane.xlu0 %299
        %301 = vadd.xlane.f32.xlu0 %v278
        %v302 = vpop.xlane.xlu0 %301
        %303 = vadd.xlane.f32.xlu0 %v279
        %v304 = vpop.xlane.xlu0 %303
        %305 = vadd.xlane.f32.xlu0 %v280
        %v306 = vpop.xlane.xlu0 %305
        %307 = vadd.xlane.f32.xlu0 %v281
        %v308 = vpop.xlane.xlu0 %307
        %309 = vadd.xlane.f32.xlu0 %v282
        %v310 = vpop.xlane.xlu0 %309
        %311 = vadd.xlane.f32.xlu0 %v283
        %v312 = vpop.xlane.xlu0 %311
        %313 = vadd.xlane.f32.xlu0 %v284
        %v314 = vpop.xlane.xlu0 %313
        %315 = vadd.xlane.f32.xlu0 %v285
        %v316 = vpop.xlane.xlu0 %315
        %317 = vadd.xlane.f32.xlu0 %v286
        %v318 = vpop.xlane.xlu0 %317
        %319 = vadd.xlane.f32.xlu0 %v287
        %v320 = vpop.xlane.xlu0 %319
        %321 = vadd.xlane.f32.xlu0 %v288
        %v322 = vpop.xlane.xlu0 %321
        %v323 = vmul.f32 %v292, 0.0078125
        %v324 = vmul.f32 %v294, 0.0078125
        %v325 = vmul.f32 %v296, 0.0078125
        %v326 = vmul.f32 %v298, 0.0078125
        %v327 = vmul.f32 %v300, 0.0078125
        %v328 = vmul.f32 %v302, 0.0078125
        %v329 = vmul.f32 %v304, 0.0078125
        %v330 = vmul.f32 %v306, 0.0078125
        %v331 = vmul.f32 %v308, 0.0078125
        %v332 = vmul.f32 %v310, 0.0078125
        %v333 = vmul.f32 %v312, 0.0078125
        %v334 = vmul.f32 %v314, 0.0078125
        %v335 = vmul.f32 %v316, 0.0078125
        %v336 = vmul.f32 %v318, 0.0078125
        %v337 = vmul.f32 %v320, 0.0078125
        %v338 = vmul.f32 %v322, 0.0078125
        %v339 = vmul.f32 %v273, %v273
        %v340 = vmul.f32 %v274, %v274
        %v341 = vmul.f32 %v275, %v275
        %v342 = vmul.f32 %v276, %v276
        %v343 = vmul.f32 %v277, %v277
        %v344 = vmul.f32 %v278, %v278
        %v345 = vmul.f32 %v279, %v279
        %v346 = vmul.f32 %v280, %v280
        %v347 = vmul.f32 %v281, %v281
        %v348 = vmul.f32 %v282, %v282
        %v349 = vmul.f32 %v283, %v283
        %v350 = vmul.f32 %v284, %v284
        %v351 = vmul.f32 %v285, %v285
        %v352 = vmul.f32 %v286, %v286
        %v353 = vmul.f32 %v287, %v287
        %v354 = vmul.f32 %v288, %v288
        %355 = vadd.xlane.f32.xlu0 %v339
        %v356 = vpop.xlane.xlu0 %355
        %357 = vadd.xlane.f32.xlu0 %v340
        %v358 = vpop.xlane.xlu0 %357
        %359 = vadd.xlane.f32.xlu0 %v341
        %v360 = vpop.xlane.xlu0 %359
        %361 = vadd.xlane.f32.xlu0 %v342
        %v362 = vpop.xlane.xlu0 %361
        %363 = vadd.xlane.f32.xlu0 %v343
        %v364 = vpop.xlane.xlu0 %363
        %365 = vadd.xlane.f32.xlu0 %v344
        %v366 = vpop.xlane.xlu0 %365
        %367 = vadd.xlane.f32.xlu0 %v345
        %v368 = vpop.xlane.xlu0 %367
        %369 = vadd.xlane.f32.xlu0 %v346
        %v370 = vpop.xlane.xlu0 %369
        %371 = vadd.xlane.f32.xlu0 %v347
        %v372 = vpop.xlane.xlu0 %371
        %373 = vadd.xlane.f32.xlu0 %v348
        %v374 = vpop.xlane.xlu0 %373
        %375 = vadd.xlane.f32.xlu0 %v349
        %v376 = vpop.xlane.xlu0 %375
        %377 = vadd.xlane.f32.xlu0 %v350
        %v378 = vpop.xlane.xlu0 %377
        %379 = vadd.xlane.f32.xlu0 %v351
        %v380 = vpop.xlane.xlu0 %379
        %381 = vadd.xlane.f32.xlu0 %v352
        %v382 = vpop.xlane.xlu0 %381
        %383 = vadd.xlane.f32.xlu0 %v353
        %v384 = vpop.xlane.xlu0 %383
        %385 = vadd.xlane.f32.xlu0 %v354
        %v386 = vpop.xlane.xlu0 %385
        %v387 = vmul.f32 %v356, 0.0078125
        %v388 = vmul.f32 %v358, 0.0078125
        %v389 = vmul.f32 %v360, 0.0078125
        %v390 = vmul.f32 %v362, 0.0078125
        %v391 = vmul.f32 %v364, 0.0078125
        %v392 = vmul.f32 %v366, 0.0078125
        %v393 = vmul.f32 %v368, 0.0078125
        %v394 = vmul.f32 %v370, 0.0078125
        %v395 = vmul.f32 %v372, 0.0078125
        %v396 = vmul.f32 %v374, 0.0078125
        %v397 = vmul.f32 %v376, 0.0078125
        %v398 = vmul.f32 %v378, 0.0078125
        %v399 = vmul.f32 %v380, 0.0078125
        %v400 = vmul.f32 %v382, 0.0078125
        %v401 = vmul.f32 %v384, 0.0078125
        %v402 = vmul.f32 %v386, 0.0078125
        %v403 = vmul.f32 %v323, %v323
        %v404 = vmul.f32 %v324, %v324
        %v405 = vmul.f32 %v325, %v325
        %v406 = vmul.f32 %v326, %v326
        %v407 = vmul.f32 %v327, %v327
        %v408 = vmul.f32 %v328, %v328
        %v409 = vmul.f32 %v329, %v329
        %v410 = vmul.f32 %v330, %v330
        %v411 = vmul.f32 %v331, %v331
        %v412 = vmul.f32 %v332, %v332
        %v413 = vmul.f32 %v333, %v333
        %v414 = vmul.f32 %v334, %v334
        %v415 = vmul.f32 %v335, %v335
        %v416 = vmul.f32 %v336, %v336
        %v417 = vmul.f32 %v337, %v337
        %v418 = vmul.f32 %v338, %v338
        %v419 = vsub.f32 %v387, %v403
        %v420 = vsub.f32 %v388, %v404
        %v421 = vsub.f32 %v389, %v405
        %v422 = vsub.f32 %v390, %v406
        %v423 = vsub.f32 %v391, %v407
        %v424 = vsub.f32 %v392, %v408
        %v425 = vsub.f32 %v393, %v409
        %v426 = vsub.f32 %v394, %v410
        %v427 = vsub.f32 %v395, %v411
        %v428 = vsub.f32 %v396, %v412
        %v429 = vsub.f32 %v397, %v413
        %v430 = vsub.f32 %v398, %v414
        %v431 = vsub.f32 %v399, %v415
        %v432 = vsub.f32 %v400, %v416
        %v433 = vsub.f32 %v401, %v417
        %v434 = vsub.f32 %v402, %v418
        %v435 = vmax.f32 %v419, 0.0
        %v436 = vmax.f32 %v420, 0.0
        %v437 = vmax.f32 %v421, 0.0
        %v438 = vmax.f32 %v422, 0.0
        %v439 = vmax.f32 %v423, 0.0
        %v440 = vmax.f32 %v424, 0.0
        %v441 = vmax.f32 %v425, 0.0
        %v442 = vmax.f32 %v426, 0.0
        %v443 = vmax.f32 %v427, 0.0
        %v444 = vmax.f32 %v428, 0.0
        %v445 = vmax.f32 %v429, 0.0
        %v446 = vmax.f32 %v430, 0.0
        %v447 = vmax.f32 %v431, 0.0
        %v448 = vmax.f32 %v432, 0.0
        %v449 = vmax.f32 %v433, 0.0
        %v450 = vmax.f32 %v434, 0.0
        %v451 = vadd.f32 %v435, 1e-05
        %v452 = vadd.f32 %v436, 1e-05
        %v453 = vadd.f32 %v437, 1e-05
        %v454 = vadd.f32 %v438, 1e-05
        %v455 = vadd.f32 %v439, 1e-05
        %v456 = vadd.f32 %v440, 1e-05
        %v457 = vadd.f32 %v441, 1e-05
        %v458 = vadd.f32 %v442, 1e-05
        %v459 = vadd.f32 %v443, 1e-05
        %v460 = vadd.f32 %v444, 1e-05
        %v461 = vadd.f32 %v445, 1e-05
        %v462 = vadd.f32 %v446, 1e-05
        %v463 = vadd.f32 %v447, 1e-05
        %v464 = vadd.f32 %v448, 1e-05
        %v465 = vadd.f32 %v449, 1e-05
        %v466 = vadd.f32 %v450, 1e-05
        %v467 = vrsqrt.pop %v451
        %v468 = vrsqrt.pop %v452
        %v469 = vrsqrt.pop %v453
        %v470 = vrsqrt.pop %v454
        %v471 = vrsqrt.pop %v455
        %v472 = vrsqrt.pop %v456
        %v473 = vrsqrt.pop %v457
        %v474 = vrsqrt.pop %v458
        %v475 = vrsqrt.pop %v459
        %v476 = vrsqrt.pop %v460
        %v477 = vrsqrt.pop %v461
        %v478 = vrsqrt.pop %v462
        %v479 = vrsqrt.pop %v463
        %v480 = vrsqrt.pop %v464
        %v481 = vrsqrt.pop %v465
        %v482 = vrsqrt.pop %v466
        %v483 = vsub.f32 %v273, %v323
        %v484 = vsub.f32 %v274, %v324
        %v485 = vsub.f32 %v275, %v325
        %v486 = vsub.f32 %v276, %v326
        %v487 = vsub.f32 %v277, %v327
        %v488 = vsub.f32 %v278, %v328
        %v489 = vsub.f32 %v279, %v329
        %v490 = vsub.f32 %v280, %v330
        %v491 = vsub.f32 %v281, %v331
        %v492 = vsub.f32 %v282, %v332
        %v493 = vsub.f32 %v283, %v333
        %v494 = vsub.f32 %v284, %v334
        %v495 = vsub.f32 %v285, %v335
        %v496 = vsub.f32 %v286, %v336
        %v497 = vsub.f32 %v287, %v337
        %v498 = vsub.f32 %v288, %v338
        %v499 = vmul.f32 %v483, %v467
        %v500 = vmul.f32 %v484, %v468
        %v501 = vmul.f32 %v485, %v469
        %v502 = vmul.f32 %v486, %v470
        %v503 = vmul.f32 %v487, %v471
        %v504 = vmul.f32 %v488, %v472
        %v505 = vmul.f32 %v489, %v473
        %v506 = vmul.f32 %v490, %v474
        %v507 = vmul.f32 %v491, %v475
        %v508 = vmul.f32 %v492, %v476
        %v509 = vmul.f32 %v493, %v477
        %v510 = vmul.f32 %v494, %v478
        %v511 = vmul.f32 %v495, %v479
        %v512 = vmul.f32 %v496, %v480
        %v513 = vmul.f32 %v497, %v481
        %v514 = vmul.f32 %v498, %v482
        %v516 = vlaneseq
        %v517 = vshrl.u32 %v516, 7
        %v518 = vsub.s32 0, %v517
        %v519 = vrot.slane %v289, %v518
        %v521 = vmul.f32 %v499, %v519
        %v522 = vmul.f32 %v500, %v519
        %v523 = vmul.f32 %v501, %v519
        %v524 = vmul.f32 %v502, %v519
        %v525 = vmul.f32 %v503, %v519
        %v526 = vmul.f32 %v504, %v519
        %v527 = vmul.f32 %v505, %v519
        %v528 = vmul.f32 %v506, %v519
        %v529 = vmul.f32 %v507, %v519
        %v530 = vmul.f32 %v508, %v519
        %v531 = vmul.f32 %v509, %v519
        %v532 = vmul.f32 %v510, %v519
        %v533 = vmul.f32 %v511, %v519
        %v534 = vmul.f32 %v512, %v519
        %v535 = vmul.f32 %v513, %v519
        %v536 = vmul.f32 %v514, %v519
        %v538 = vlaneseq
        %v539 = vshrl.u32 %v538, 7
        %v540 = vsub.s32 0, %v539
        %v541 = vrot.slane %v290, %v540
        %v543 = vadd.f32 %v521, %v541
        %v544 = vadd.f32 %v522, %v541
        %v545 = vadd.f32 %v523, %v541
        %v546 = vadd.f32 %v524, %v541
        %v547 = vadd.f32 %v525, %v541
        %v548 = vadd.f32 %v526, %v541
        %v549 = vadd.f32 %v527, %v541
        %v550 = vadd.f32 %v528, %v541
        %v551 = vadd.f32 %v529, %v541
        %v552 = vadd.f32 %v530, %v541
        %v553 = vadd.f32 %v531, %v541
        %v554 = vadd.f32 %v532, %v541
        %v555 = vadd.f32 %v533, %v541
        %v556 = vadd.f32 %v534, %v541
        %v557 = vadd.f32 %v535, %v541
        %v558 = vadd.f32 %v536, %v541
        %v559 = vpack.c.bf16 %v544, %v543
        %v560 = vpack.c.bf16 %v546, %v545
        %v561 = vpack.c.bf16 %v548, %v547
        %v562 = vpack.c.bf16 %v550, %v549
        %v563 = vpack.c.bf16 %v552, %v551
        %v564 = vpack.c.bf16 %v554, %v553
        %v565 = vpack.c.bf16 %v556, %v555
        %v566 = vpack.c.bf16 %v558, %v557
        %v567 = vld [vmem:[#allocation7] sm:$0xff]
        %v568 = vld [vmem:[#allocation7 + $0x8] sm:$0xff]
        %v569 = vld [vmem:[#allocation7 + $0x10] sm:$0xff]
        %v570 = vld [vmem:[#allocation7 + $0x18] sm:$0xff]
        %v571 = vld [vmem:[#allocation7 + $0x20] sm:$0xff]
        %v572 = vld [vmem:[#allocation7 + $0x28] sm:$0xff]
        %v573 = vld [vmem:[#allocation7 + $0x30] sm:$0xff]
        %v574 = vld [vmem:[#allocation7 + $0x38] sm:$0xff]
        %v575 = vld [vmem:[#allocation7 + $0x40] sm:$0xff]
        %v576 = vld [vmem:[#allocation7 + $0x48] sm:$0xff]
        %v577 = vld [vmem:[#allocation7 + $0x50] sm:$0xff]
        %v578 = vld [vmem:[#allocation7 + $0x58] sm:$0xff]
        %v579 = vld [vmem:[#allocation7 + $0x60] sm:$0xff]
        %v580 = vld [vmem:[#allocation7 + $0x68] sm:$0xff]
        %v581 = vld [vmem:[#allocation7 + $0x70] sm:$0xff]
        %v582 = vld [vmem:[#allocation7 + $0x78] sm:$0xff]
        %v583 = vld [vmem:[%s4] sm:$0x3]
        %v585 = vlaneseq
        %v586 = vshrl.u32 %v585, 7
        %v587 = vsub.s32 0, %v586
        %v588 = vrot.slane %v583, %v587
        %v589 = vlaneseq
        %v590 = vshrl.u32 %v589, 7
        %v591 = vsub.s32 1, %v590
        %v592 = vrot.slane %v583, %v591
        %v611 = vunpack.c.l.b16 %v567
        %v612 = vunpack.c.h.b16 %v567
        %v613 = vunpack.c.l.b16 %v568
        %v614 = vunpack.c.h.b16 %v568
        %v615 = vunpack.c.l.b16 %v569
        %v616 = vunpack.c.h.b16 %v569
        %v617 = vunpack.c.l.b16 %v570
        %v618 = vunpack.c.h.b16 %v570
        %v619 = vunpack.c.l.b16 %v571
        %v620 = vunpack.c.h.b16 %v571
        %v621 = vunpack.c.l.b16 %v572
        %v622 = vunpack.c.h.b16 %v572
        %v623 = vunpack.c.l.b16 %v573
        %v624 = vunpack.c.h.b16 %v573
        %v625 = vunpack.c.l.b16 %v574
        %v626 = vunpack.c.h.b16 %v574
        %v627 = vunpack.c.l.b16 %v575
        %v628 = vunpack.c.h.b16 %v575
        %v629 = vunpack.c.l.b16 %v576
        %v630 = vunpack.c.h.b16 %v576
        %v631 = vunpack.c.l.b16 %v577
        %v632 = vunpack.c.h.b16 %v577
        %v633 = vunpack.c.l.b16 %v578
        %v634 = vunpack.c.h.b16 %v578
        %v635 = vunpack.c.l.b16 %v579
        %v636 = vunpack.c.h.b16 %v579
        %v637 = vunpack.c.l.b16 %v580
        %v638 = vunpack.c.h.b16 %v580
        %v639 = vunpack.c.l.b16 %v581
        %v640 = vunpack.c.h.b16 %v581
        %v641 = vunpack.c.l.b16 %v582
        %v642 = vunpack.c.h.b16 %v582
        %v643 = vpack.c.b16 %v613, %v611
        %v644 = vpack.c.b16 %v614, %v612
        %v645 = vpack.c.b16 %v617, %v615
        %v646 = vpack.c.b16 %v618, %v616
        %v647 = vpack.c.b16 %v621, %v619
        %v648 = vpack.c.b16 %v622, %v620
        %v649 = vpack.c.b16 %v625, %v623
        %v650 = vpack.c.b16 %v626, %v624
        %v651 = vpack.c.b16 %v629, %v627
        %v652 = vpack.c.b16 %v630, %v628
        %v653 = vpack.c.b16 %v633, %v631
        %v654 = vpack.c.b16 %v634, %v632
        %v655 = vpack.c.b16 %v637, %v635
        %v656 = vpack.c.b16 %v638, %v636
        %v657 = vpack.c.b16 %v641, %v639
        %v658 = vpack.c.b16 %v642, %v640
        %675 = vmatprep.subr.bf16.mxu0 %v658
        %676 = vmatpush1.bf16.msra.mxu0 %v657
        %677 = vmatprep.subr.bf16.mxu0 %v656
        %678 = vmatpush1.bf16.msra.mxu0 %v655
        %679 = vmatprep.subr.bf16.mxu0 %v654
        %680 = vmatpush1.bf16.msra.mxu0 %v653
        %681 = vmatprep.subr.bf16.mxu0 %v652
        %682 = vmatpush1.bf16.msra.mxu0 %v651
        %683 = vmatprep.subr.bf16.mxu0 %v650
        %684 = vmatpush1.bf16.msra.mxu0 %v649
        %685 = vmatprep.subr.bf16.mxu0 %v648
        %686 = vmatpush1.bf16.msra.mxu0 %v647
        %687 = vmatprep.subr.bf16.mxu0 %v646
        %688 = vmatpush1.bf16.msra.mxu0 %v645
        %689 = vmatprep.subr.bf16.mxu0 %v644
        %690 = vmatpush1.bf16.msra.mxu0 %v643
        %691 = vmatprep.subr.bf16.mxu0 0
        %692 = vmatpush2.bf16.msra.mxu0 0
        %693 = vmatprep.subr.bf16.mxu0 0
        %694 = vmatpush2.bf16.msra.mxu0 0
        %695 = vmatprep.subr.bf16.mxu0 0
        %696 = vmatpush2.bf16.msra.mxu0 0
        %697 = vmatprep.subr.bf16.mxu0 0
        %698 = vmatpush2.bf16.msra.mxu0 0
        %699 = vmatprep.subr.bf16.mxu0 0
        %700 = vmatpush2.bf16.msra.mxu0 0
        %701 = vmatprep.subr.bf16.mxu0 0
        %702 = vmatpush2.bf16.msra.mxu0 0
        %703 = vmatprep.subr.bf16.mxu0 0
        %704 = vmatpush2.bf16.msra.mxu0 0
        %705 = vmatprep.subr.bf16.mxu0 0
        %706 = vmatpush2.bf16.msra.mxu0 0
        %707 = vmatprep.mubr.bf16.mxu0 0
        %708 = vmatmul.mubr.bf16.gmra.mxu0 %v559
        %v709 = vpop.f32.mrf.mxu0
        %v710 = vadd.f32 %v588, %v709
        %v711 = vpop.f32.mrf.mxu0
        %v712 = vadd.f32 %v592, %v711
        %v713 = vpop.f32.mrf.mxu0
        %v714 = vadd.f32 %v588, %v713
        %v715 = vpop.f32.mrf.mxu0
        %v716 = vadd.f32 %v592, %v715
        %717 = vmatprep.mubr.bf16.mxu0 0
        %718 = vmatmul.mubr.bf16.gmra.mxu0 %v560
        %v719 = vpop.f32.mrf.mxu0
        %v720 = vadd.f32 %v588, %v719
        %v721 = vpop.f32.mrf.mxu0
        %v722 = vadd.f32 %v592, %v721
        %v723 = vpop.f32.mrf.mxu0
        %v724 = vadd.f32 %v588, %v723
        %v725 = vpop.f32.mrf.mxu0
        %v726 = vadd.f32 %v592, %v725
        %727 = vmatprep.mubr.bf16.mxu0 0
        %728 = vmatmul.mubr.bf16.gmra.mxu0 %v561
        %v729 = vpop.f32.mrf.mxu0
        %v730 = vadd.f32 %v588, %v729
        %v731 = vpop.f32.mrf.mxu0
        %v732 = vadd.f32 %v592, %v731
        %v733 = vpop.f32.mrf.mxu0
        %v734 = vadd.f32 %v588, %v733
        %v735 = vpop.f32.mrf.mxu0
        %v736 = vadd.f32 %v592, %v735
        %737 = vmatprep.mubr.bf16.mxu0 0
        %738 = vmatmul.mubr.bf16.gmra.mxu0 %v562
        %v739 = vpop.f32.mrf.mxu0
        %v740 = vadd.f32 %v588, %v739
        %v741 = vpop.f32.mrf.mxu0
        %v742 = vadd.f32 %v592, %v741
        %v743 = vpop.f32.mrf.mxu0
        %v744 = vadd.f32 %v588, %v743
        %v745 = vpop.f32.mrf.mxu0
        %v746 = vadd.f32 %v592, %v745
        %747 = vmatprep.mubr.bf16.mxu0 0
        %748 = vmatmul.mubr.bf16.gmra.mxu0 %v563
        %v749 = vpop.f32.mrf.mxu0
        %v750 = vadd.f32 %v588, %v749
        %v751 = vpop.f32.mrf.mxu0
        %v752 = vadd.f32 %v592, %v751
        %v753 = vpop.f32.mrf.mxu0
        %v754 = vadd.f32 %v588, %v753
        %v755 = vpop.f32.mrf.mxu0
        %v756 = vadd.f32 %v592, %v755
        %757 = vmatprep.mubr.bf16.mxu0 0
        %758 = vmatmul.mubr.bf16.gmra.mxu0 %v564
        %v759 = vpop.f32.mrf.mxu0
        %v760 = vadd.f32 %v588, %v759
        %v761 = vpop.f32.mrf.mxu0
        %v762 = vadd.f32 %v592, %v761
        %v763 = vpop.f32.mrf.mxu0
        %v764 = vadd.f32 %v588, %v763
        %v765 = vpop.f32.mrf.mxu0
        %v766 = vadd.f32 %v592, %v765
        %767 = vmatprep.mubr.bf16.mxu0 0
        %768 = vmatmul.mubr.bf16.gmra.mxu0 %v565
        %v769 = vpop.f32.mrf.mxu0
        %v770 = vadd.f32 %v588, %v769
        %v771 = vpop.f32.mrf.mxu0
        %v772 = vadd.f32 %v592, %v771
        %v773 = vpop.f32.mrf.mxu0
        %v774 = vadd.f32 %v588, %v773
        %v775 = vpop.f32.mrf.mxu0
        %v776 = vadd.f32 %v592, %v775
        %777 = vmatprep.mubr.bf16.mxu0 0
        %778 = vmatmul.mubr.bf16.gmra.mxu0 %v566
        %v779 = vpop.f32.mrf.mxu0
        %v780 = vadd.f32 %v588, %v779
        %v781 = vpop.f32.mrf.mxu0
        %v782 = vadd.f32 %v592, %v781
        %v783 = vpop.f32.mrf.mxu0
        %v784 = vadd.f32 %v588, %v783
        %v785 = vpop.f32.mrf.mxu0
        %v786 = vadd.f32 %v592, %v785
        %787 = vdwg.mxu0
        %788 = vst [vmem:[%s269] sm:$0xff] %v710
        %789 = vst [vmem:[%s269 + $0x8] sm:$0xff] %v712
        %790 = vst [vmem:[%s269 + $0x10] sm:$0xff] %v714
        %791 = vst [vmem:[%s269 + $0x18] sm:$0xff] %v716
        %792 = vst [vmem:[%s269 + $0x20] sm:$0xff] %v720
        %793 = vst [vmem:[%s269 + $0x28] sm:$0xff] %v722
        %794 = vst [vmem:[%s269 + $0x30] sm:$0xff] %v724
        %795 = vst [vmem:[%s269 + $0x38] sm:$0xff] %v726
        %796 = vst [vmem:[%s269 + $0x40] sm:$0xff] %v730
        %797 = vst [vmem:[%s269 + $0x48] sm:$0xff] %v732
        %798 = vst [vmem:[%s269 + $0x50] sm:$0xff] %v734
        %799 = vst [vmem:[%s269 + $0x58] sm:$0xff] %v736
        %800 = vst [vmem:[%s269 + $0x60] sm:$0xff] %v740
        %801 = vst [vmem:[%s269 + $0x68] sm:$0xff] %v742
        %802 = vst [vmem:[%s269 + $0x70] sm:$0xff] %v744
        %803 = vst [vmem:[%s269 + $0x78] sm:$0xff] %v746
        %804 = vst [vmem:[%s269 + $0x80] sm:$0xff] %v750
        %805 = vst [vmem:[%s269 + $0x88] sm:$0xff] %v752
        %806 = vst [vmem:[%s269 + $0x90] sm:$0xff] %v754
        %807 = vst [vmem:[%s269 + $0x98] sm:$0xff] %v756
        %808 = vst [vmem:[%s269 + $0xa0] sm:$0xff] %v760
        %809 = vst [vmem:[%s269 + $0xa8] sm:$0xff] %v762
        %810 = vst [vmem:[%s269 + $0xb0] sm:$0xff] %v764
        %811 = vst [vmem:[%s269 + $0xb8] sm:$0xff] %v766
        %812 = vst [vmem:[%s269 + $0xc0] sm:$0xff] %v770
        %813 = vst [vmem:[%s269 + $0xc8] sm:$0xff] %v772
        %814 = vst [vmem:[%s269 + $0xd0] sm:$0xff] %v774
        %815 = vst [vmem:[%s269 + $0xd8] sm:$0xff] %v776
        %816 = vst [vmem:[%s269 + $0xe0] sm:$0xff] %v780
        %817 = vst [vmem:[%s269 + $0xe8] sm:$0xff] %v782
        %818 = vst [vmem:[%s269 + $0xf0] sm:$0xff] %v784
        %819 = vst [vmem:[%s269 + $0xf8] sm:$0xff] %v786
        %s820 = sand.u32 %s141, 1
        %s821 = scalar_lea.sflag [#allocation4], %s820
        %s822 = sand.u32 %s141, 1
        %s823 = smul.addr %s822, 256
        %s824 = scalar_lea.vmem [#allocation8], %s823
        // Predicated region
        $region53: #{tpu_custom_call.1} parent=39 // pred_check
          %p825 = pneg %p151
        $region54: #{tpu_custom_call.1} parent=39 // pred_check_branch
          %827 = sbr.rel (%p825) target = $region56
        $region55: #{tpu_custom_call.1} parent=39 // pred_region
          %s828 = smul.u32 16, %s23
          %s830 = ssub.s32 4096, 4096
          %831 = vsyncadd %s821, %s830
          %s832 = smul.addr %s828, 2
          %s833 = smul.addr %s832, 128
          %s834 = scalar_lea.hbm %s5, %s833
          %s835 = sshll.u32 %s824, 4
          %s836 = int_to_ptr.vmem [resolvable:$true] %s835
          %841 = dma.vmem_to_hbm [thread:$0]  %s836, 4096, %s834, %s821, 256, 256, 16
        $region56: #{tpu_custom_call.1} parent=39 // pred_fallthru
          _
      $region40: #{tpu_custom_call.1} parent=5 // pred_fallthru
        _
      %p842 = scmp.le.s32.totalorder 2, %s18
      // Predicated region
      $region57: #{tpu_custom_call.1} parent=5 // pred_check
        %p843 = pneg %p842
      $region58: #{tpu_custom_call.1} parent=5 // pred_check_branch
        %845 = sbr.rel (%p843) target = $region60
      $region59: #{tpu_custom_call.1} parent=5 // pred_region
        %s846 = ssub.s32 %s18, 2
        // Predicated region
        $region61: #{tpu_custom_call.1} parent=59 // pred_check
          %p847 = pneg %p157
        $region62: #{tpu_custom_call.1} parent=59 // pred_check_branch
          %849 = sbr.rel (%p847) target = $region64
        $region63: #{tpu_custom_call.1} parent=59 // pred_region
          %s850 = sand.u32 %s142, 1
          %s851 = scalar_lea.sflag [#allocation4], %s850
          %s852 = sand.u32 %s142, 1
          %s853 = smul.addr %s852, 256
          %s854 = scalar_lea.vmem [#allocation8], %s853
          %855 = dma.done %s851, 4096
        $region64: #{tpu_custom_call.1} parent=59 // pred_fallthru
          _
      $region60: #{tpu_custom_call.1} parent=5 // pred_fallthru
        _
    $region6: #{tpu_custom_call.1} parent=1 // loop_footer
      %s22 = sadd.s32 1, %s18
    $region7: #{tpu_custom_call.1} parent=1 // loop_footer_branch
      %17 = sbr.rel target = $region3
    $region8: #{tpu_custom_call.1} parent=1 // loop_exit
      _
    %856 = vsyncpa [#allocation3], 1
    %s857 = scalar_lea.sflag [#allocation3], 1
    %858 = vsyncpa %s857, 1
    %859 = vsyncpa [#allocation6], 1
    %860 = vsyncpa [#allocation4], 1
    %s861 = scalar_lea.sflag [#allocation4], 1
    %862 = vsyncpa %s861, 1

</llo_original>
